<compile_context>
chip_gen: v6e
topology: v6e:2x2x1
jax: 0.10.0
libtpu: 0.0.40
codegen_flags: <defaults>
</compile_context>

<pallas_src>
import functools

import jax
import jax.numpy as jnp
from jax.experimental import pallas as pl
from jax.experimental.pallas import tpu as pltpu

_LANES = 128
_SUBLANES = 8
_MAX_TM = 4096                  # rows (of 128 lanes) per grid step
_VMEM_TILE_BUDGET = 24 << 20    # double-buffered input tiles + acc scratch
_VMEM_LIMIT = 48 << 20          # scoped-VMEM cap (< v7x's 64 MiB physical)
_EPS = 1e-8


def _round_up(x, m):
    return ((x + m - 1) // m) * m


def _cdiv(a, b):
    return -(-a // b)


# -----------------------------------------------------------------------------
# Lane-dense element-stream kernel (K == 1, or small K flattened onto lanes).
# Every ref is a dense (tm, 128) tile; acc is a (tm, 128) f32 scratch.
# -----------------------------------------------------------------------------
def _make_dense_kernel(scale, n_rows, tm, steps):
    def kernel(o_ref, t0_ref, t1_ref, w_ref, loss_ref, acc_ref):
        c = pl.program_id(0)          # TensorCore split ("parallel")
        i = pl.program_id(1)          # reduction steps ("arbitrary")

        @pl.when(i == 0)
        def _init():
            acc_ref[...] = jnp.zeros_like(acc_ref)

        # Upcast after the DMA: inputs stream at their native dtype (bf16 ok).
        o = o_ref[...].astype(jnp.float32)
        t0 = t0_ref[...].astype(jnp.float32)
        t1 = t1_ref[...].astype(jnp.float32)
        w = w_ref[...].astype(jnp.float32)

        # Mask the rows of the final (partial / phantom) tile.  The data is
        # NOT padded to a tile multiple; out-of-bounds rows may hold NaN/Inf
        # bit patterns, so the mask is applied to the finished product.
        tile = c * steps + i
        row = tile * tm + jax.lax.broadcasted_iota(jnp.int32, o.shape, 0)
        valid = row < n_rows

        total = (t0 * jnp.log(1.0 - o + _EPS) + t1 * jnp.log(o + _EPS)) * w
        acc_ref[...] += jnp.where(valid, total, 0.0)     # pure VPU add / step

        @pl.when(i == steps - 1)
        def _finalize():
            # One cross-sublane collapse + the -1 / -1/(B*T) epilogue scale.
            loss_ref[...] = jnp.sum(acc_ref[...], axis=0, keepdims=True) * scale

    return kernel


def _censored_loss_dense(out2d, targets, weights, scale, k):
    m = out2d.shape[0]
    n = m * k

    # Element-level streams.  reshape() of contiguous data is free; the only
    # real staging left is the targets column extraction (+ repeat for K > 1).
    o = jnp.reshape(out2d, (n,))
    t0 = jnp.reshape(targets[:, :, 0], (m,))
    t1 = jnp.reshape(targets[:, :, 1], (m,))
    w = jnp.reshape(weights, (m,))
    if k > 1:
        t0 = jnp.repeat(t0, k)
        t1 = jnp.repeat(t1, k)
        w = jnp.repeat(w, k)

    # Pad only to the next (8, 128) vreg multiple (<= 1023 elements) so the
    # lane-dense reshape is legal -- never to a full tile multiple.
    n_pad = _round_up(n, _SUBLANES * _LANES)
    if n_pad != n:
        pad = (0, n_pad - n)
        o = jnp.pad(o, pad)      # zeros: log(eps) is finite and w == 0 there
        t0 = jnp.pad(t0, pad)
        t1 = jnp.pad(t1, pad)
        w = jnp.pad(w, pad)
    n_rows = n_pad // _LANES
    o = o.reshape(n_rows, _LANES)
    t0 = t0.reshape(n_rows, _LANES)
    t1 = t1.reshape(n_rows, _LANES)
    w = w.reshape(n_rows, _LANES)

    # Tile size from a double-buffer VMEM budget (v7x-safe, large on v5e/v6e).
    stream_bytes = sum(x.dtype.itemsize for x in (o, t0, t1, w))
    per_row = 2 * _LANES * stream_bytes + _LANES * 4     # 2 buffers + f32 acc
    tm = max(_SUBLANES,
             min(_MAX_TM,
                 (_VMEM_TILE_BUDGET // per_row) // _SUBLANES * _SUBLANES))
    tm = min(tm, n_rows)

    tiles = _cdiv(n_rows, tm)
    nsplit = 2 if tiles >= 2 else 1       # leading axis for the two v7x TCs
    steps = _cdiv(tiles, nsplit)
    max_tile = tiles - 1

    # Phantom tiles (nsplit*steps > tiles) are clamped onto the last real
    # tile; the in-kernel row mask (built from the *unclamped* id) zeroes them.
    def row_idx(c, i):
        return (jnp.minimum(c * steps + i, max_tile), 0)

    row_spec = pl.BlockSpec((tm, _LANES), row_idx)

    loss = pl.pallas_call(
        _make_dense_kernel(scale, n_rows, tm, steps),
        out_shape=jax.ShapeDtypeStruct((1, nsplit * _LANES), jnp.float32),
        grid_spec=pltpu.PrefetchScalarGridSpec(
            num_scalar_prefetch=0,
            grid=(nsplit, steps),
            in_specs=[row_spec, row_spec, row_spec, row_spec],
            out_specs=pl.BlockSpec((1, _LANES), lambda c, i: (0, c)),
            scratch_shapes=[pltpu.VMEM((tm, _LANES), jnp.float32)],
        ),
        compiler_params=pltpu.CompilerParams(
            # TODO(synk): on v7x, flip axis 0 to pltpu.CORE_PARALLEL once a
            # trace confirms both TensorCores engage (kept "parallel" here so
            # it also runs cleanly on single-core v5e/v6e).
            dimension_semantics=("parallel", "arbitrary"),
            vmem_limit_bytes=_VMEM_LIMIT,
        ),
        cost_estimate=pl.CostEstimate(
            flops=8 * n,
            transcendentals=2 * n,
            bytes_accessed=int(n * o.dtype.itemsize
                               + n * (t0.dtype.itemsize + t1.dtype.itemsize
                                      + w.dtype.itemsize)),
        ),
    )(o, t0, t1, w)

    # Tiny epilogue: combine the per-core partials, then fold the 128 lanes
    # onto the K output positions (element j sits in lane j % 128; 128 % K == 0
    # so lane -> k is static).
    lanes = jnp.sum(loss.reshape(nsplit, _LANES), axis=0)
    return jnp.sum(lanes.reshape(_LANES // k, k), axis=0)


# -----------------------------------------------------------------------------
# Fallback for K that does not divide 128 (or K > 64): M on sublanes, K kept
# UNPADDED on lanes, targets/weights read in their natural layout (no staging).
# -----------------------------------------------------------------------------
def _make_wide_kernel(scale, m, tm):
    def kernel(o_ref, tgt_ref, w_ref, loss_ref, acc_ref):
        i = pl.program_id(0)

        @pl.when(i == 0)
        def _init():
            acc_ref[...] = jnp.zeros_like(acc_ref)

        o = o_ref[...].astype(jnp.float32)           # (tm, K)
        t0 = tgt_ref[:, 0:1].astype(jnp.float32)     # (tm, 1) -> lane bcast
        t1 = tgt_ref[:, 1:2].astype(jnp.float32)
        w = w_ref[...].astype(jnp.float32)           # (tm, 1)

        row = i * tm + jax.lax.broadcasted_iota(jnp.int32, o.shape, 0)
        valid = row < m

        total = (t0 * jnp.log(1.0 - o + _EPS) + t1 * jnp.log(o + _EPS)) * w
        acc_ref[...] += jnp.where(valid, total, 0.0)

        @pl.when(i == pl.num_programs(0) - 1)
        def _finalize():
            loss_ref[...] = jnp.sum(acc_ref[...], axis=0, keepdims=True) * scale

    return kernel


def _censored_loss_wide(out2d, targets, weights, scale, k):
    m = out2d.shape[0]
    v = targets.shape[-1]
    tgt2d = jnp.reshape(targets, (m, v))       # free reshapes: zero staging
    w2d = jnp.reshape(weights, (m, 1))

    lanes_k = _round_up(k, _LANES)             # VMEM-footprint accounting only
    per_row = (2 * (lanes_k * out2d.dtype.itemsize
                    + _LANES * tgt2d.dtype.itemsize
                    + _LANES * w2d.dtype.itemsize)
               + lanes_k * 4)
    tm_cap = max(_SUBLANES,
                 (_VMEM_TILE_BUDGET // per_row) // _SUBLANES * _SUBLANES)
    if m >= _SUBLANES:
        tm = min(_MAX_TM, tm_cap, (m // _SUBLANES) * _SUBLANES)
    else:
        tm = m                                 # block dim == full array dim
    tiles = _cdiv(m, tm)

    loss = pl.pallas_call(
        _make_wide_kernel(scale, m, tm),
        out_shape=jax.ShapeDtypeStruct((1, k), jnp.float32),
        grid_spec=pltpu.PrefetchScalarGridSpec(
            num_scalar_prefetch=0,
            grid=(tiles,),
            in_specs=[
                pl.BlockSpec((tm, k), lambda i: (i, 0)),
                pl.BlockSpec((tm, v), lambda i: (i, 0)),
                pl.BlockSpec((tm, 1), lambda i: (i, 0)),
            ],
            out_specs=pl.BlockSpec((1, k), lambda i: (0, 0)),
            scratch_shapes=[pltpu.VMEM((tm, k), jnp.float32)],
        ),
        compiler_params=pltpu.CompilerParams(
            dimension_semantics=("arbitrary",),
            vmem_limit_bytes=_VMEM_LIMIT,
        ),
        cost_estimate=pl.CostEstimate(
            flops=8 * m * k,
            transcendentals=2 * m * k,
            bytes_accessed=int(m * k * out2d.dtype.itemsize
                               + m * (v * tgt2d.dtype.itemsize
                                      + w2d.dtype.itemsize)),
        ),
    )(out2d, tgt2d, w2d)
    return loss[0]


# -----------------------------------------------------------------------------
# Public wrapper — matches CensoredLoss_Sub.forward(outputs, (targets, weights))
# -----------------------------------------------------------------------------
@functools.partial(jax.jit, static_argnames=("reduction",))
def censored_loss_sub(outputs, targets, weights, reduction="mean"):
    """outputs: (B, T, ...) in (0,1); targets: (B, T, v); weights: (B, T).

    Returns shape (K,) with K = prod(outputs.shape[2:]) (K = 1 for (B, T)
    outputs), matching the PyTorch broadcasting of the accumulated loss.
    """
    if reduction not in ("mean", "sum"):
        raise ValueError("Unsupported reduction type. Choose 'mean' or 'sum'.")

    b, t = targets.shape[0], targets.shape[1]
    m = b * t
    out2d = jnp.reshape(outputs, (m, -1))      # (M, K); free for contiguous data
    k = out2d.shape[1]
    scale = -1.0 if reduction == "sum" else -1.0 / m

    if k <= 64 and _LANES % k == 0:
        return _censored_loss_dense(out2d, targets, weights, scale, k)
    return _censored_loss_wide(out2d, targets, weights, scale, k)


def _reference(outputs, targets, weights, reduction="mean"):
    """Pure-JAX reference mirroring the PyTorch double loop."""
    b, t = targets.shape[0], targets.shape[1]
    out = jnp.reshape(outputs, (b, t, -1)).astype(jnp.float32)
    t0 = targets[:, :, 0:1].astype(jnp.float32)
    t1 = targets[:, :, 1:2].astype(jnp.float32)
    w = weights[:, :, None].astype(jnp.float32)
    loss = jnp.sum((t0 * jnp.log(1.0 - out + _EPS)
                    + t1 * jnp.log(out + _EPS)) * w, axis=(0, 1))
    return -loss if reduction == "sum" else -loss / (b * t)


if __name__ == "__main__":
    key = jax.random.PRNGKey(0)
    k1, k2, k3, k4, k5 = jax.random.split(key, 5)

    B, T, V = 2, 8, 2
    targets = jax.random.uniform(k2, (B, T, V), dtype=jnp.float32)
    weights = jax.random.uniform(k3, (B, T), dtype=jnp.float32)

    # Case 1: K == 1 (outputs of shape (B, T)) -> lane-dense path, both reductions.
    outputs = jax.nn.sigmoid(jax.random.normal(k1, (B, T), dtype=jnp.float32))
    for red in ("mean", "sum"):
        got = censored_loss_sub(outputs, targets, weights, reduction=red)
        jax.block_until_ready(got)
        ref = _reference(outputs, targets, weights, red)
        assert jnp.allclose(got, ref, rtol=1e-5, atol=1e-5), (red, got, ref)

    # Case 2: small K > 1 (K = 4) -> flattened lane-dense path, no K padding.
    outputs4 = jax.nn.sigmoid(jax.random.normal(k4, (B, T, 4), dtype=jnp.float32))
    got4 = censored_loss_sub(outputs4, targets, weights, reduction="mean")
    jax.block_until_ready(got4)
    ref4 = _reference(outputs4, targets, weights, "mean")
    assert jnp.allclose(got4, ref4, rtol=1e-5, atol=1e-5), (got4, ref4)

    # Case 3: K = 3 (does not divide 128) -> zero-staging wide fallback path.
    outputs3 = jax.nn.sigmoid(jax.random.normal(k5, (B, T, 3), dtype=jnp.float32))
    got3 = censored_loss_sub(outputs3, targets, weights, reduction="mean")
    jax.block_until_ready(got3)
    ref3 = _reference(outputs3, targets, weights, "mean")
    assert jnp.allclose(got3, ref3, rtol=1e-5, atol=1e-5), (got3, ref3)

    # Case 4: bf16 outputs streamed at native dtype, upcast inside the kernel.
    outputs_bf16 = outputs.astype(jnp.bfloat16)
    got_bf = censored_loss_sub(outputs_bf16, targets, weights, reduction="mean")
    jax.block_until_ready(got_bf)
    ref_bf = _reference(outputs_bf16, targets, weights, "mean")
    assert jnp.allclose(got_bf, ref_bf, rtol=1e-5, atol=1e-5), (got_bf, ref_bf)

    print("KERNEL_OK")
</pallas_src>

<mosaic_0001>
module attributes {stable_mosaic.version = 11 : i64} {
  func.func @kernel(%arg0: i32, %arg1: i32, %arg2: memref<8x128xf32, #tpu.memory_space<vmem>>, %arg3: memref<8x128xf32, #tpu.memory_space<vmem>>, %arg4: memref<8x128xf32, #tpu.memory_space<vmem>>, %arg5: memref<8x128xf32, #tpu.memory_space<vmem>>, %arg6: memref<1x128xf32, #tpu.memory_space<vmem>>, %arg7: memref<8x128xf32, #tpu.memory_space<vmem>>) attributes {dimension_semantics = [#tpu.dimension_semantics<parallel>, #tpu.dimension_semantics<arbitrary>], iteration_bounds = array<i64: 1, 1>, scalar_prefetch = 0 : i64, scratch_operands = 1 : i64, tpu.core_type = #tpu.core_type<tc>, window_params = [{transform_indices = @transform_0, window_bounds = array<i64: 8, 128>}, {transform_indices = @transform_1, window_bounds = array<i64: 8, 128>}, {transform_indices = @transform_2, window_bounds = array<i64: 8, 128>}, {transform_indices = @transform_3, window_bounds = array<i64: 8, 128>}, {transform_indices = @transform_4, window_bounds = array<i64: 1, 128>}]} {
    %c0_i32 = arith.constant 0 : i32
    %0 = arith.cmpi eq, %arg1, %c0_i32 : i32
    %1 = arith.extui %0 : i1 to i32
    %c0_i32_0 = arith.constant 0 : i32
    %2 = arith.cmpi ne, %1, %c0_i32_0 : i32
    scf.if %2 {
      %cst_18 = arith.constant 0.000000e+00 : f32
      %35 = vector.broadcast %cst_18 : f32 to vector<8x128xf32>
      %c0_19 = arith.constant 0 : index
      %c0_20 = arith.constant 0 : index
      %36 = vector.load %arg7[%c0_19, %c0_20] : memref<8x128xf32, #tpu.memory_space<vmem>>, vector<8x128xf32>
      tpu.vector_store %arg7[%c0_19, %c0_20], %35 {strides = array<i32>} : memref<8x128xf32, #tpu.memory_space<vmem>>, vector<8x128xf32>,
    } else {
    }
    %c0 = arith.constant 0 : index
    %c0_1 = arith.constant 0 : index
    %3 = vector.load %arg2[%c0, %c0_1] : memref<8x128xf32, #tpu.memory_space<vmem>>, vector<8x128xf32>
    %c0_2 = arith.constant 0 : index
    %c0_3 = arith.constant 0 : index
    %4 = vector.load %arg3[%c0_2, %c0_3] : memref<8x128xf32, #tpu.memory_space<vmem>>, vector<8x128xf32>
    %c0_4 = arith.constant 0 : index
    %c0_5 = arith.constant 0 : index
    %5 = vector.load %arg4[%c0_4, %c0_5] : memref<8x128xf32, #tpu.memory_space<vmem>>, vector<8x128xf32>
    %c0_6 = arith.constant 0 : index
    %c0_7 = arith.constant 0 : index
    %6 = vector.load %arg5[%c0_6, %c0_7] : memref<8x128xf32, #tpu.memory_space<vmem>>, vector<8x128xf32>
    %c1_i32 = arith.constant 1 : i32
    %7 = arith.muli %arg0, %c1_i32 : i32
    %8 = arith.addi %7, %arg1 : i32
    %c8_i32 = arith.constant 8 : i32
    %9 = arith.muli %8, %c8_i32 : i32
    %10 = tpu.iota {dimensions = array<i32: 0>} : vector<8x128xi32>
    %11 = vector.broadcast %9 : i32 to vector<8x128xi32>
    %12 = arith.addi %11, %10 : vector<8x128xi32>
    %c8_i32_8 = arith.constant 8 : i32
    %13 = vector.broadcast %c8_i32_8 : i32 to vector<8x128xi32>
    %14 = arith.cmpi slt, %12, %13 : vector<8x128xi32>
    %cst = arith.constant 1.000000e+00 : f32
    %15 = vector.broadcast %cst : f32 to vector<8x128xf32>
    %16 = arith.subf %15, %3 : vector<8x128xf32>
    %cst_9 = arith.constant 9.99999993E-9 : f32
    %17 = vector.broadcast %cst_9 : f32 to vector<8x128xf32>
    %18 = arith.addf %16, %17 : vector<8x128xf32>
    %19 = math.log %18 : vector<8x128xf32>
    %20 = arith.mulf %4, %19 : vector<8x128xf32>
    %cst_10 = arith.constant 9.99999993E-9 : f32
    %21 = vector.broadcast %cst_10 : f32 to vector<8x128xf32>
    %22 = arith.addf %3, %21 : vector<8x128xf32>
    %23 = math.log %22 : vector<8x128xf32>
    %24 = arith.mulf %5, %23 : vector<8x128xf32>
    %25 = arith.addf %20, %24 : vector<8x128xf32>
    %26 = arith.mulf %25, %6 : vector<8x128xf32>
    %c0_11 = arith.constant 0 : index
    %c0_12 = arith.constant 0 : index
    %27 = vector.load %arg7[%c0_11, %c0_12] : memref<8x128xf32, #tpu.memory_space<vmem>>, vector<8x128xf32>
    %cst_13 = arith.constant 0.000000e+00 : f32
    %28 = vector.broadcast %cst_13 : f32 to vector<8x128xf32>
    %29 = arith.select %14, %26, %28 : vector<8x128xi1>, vector<8x128xf32>
    %30 = arith.addf %27, %29 : vector<8x128xf32>
    %c0_14 = arith.constant 0 : index
    %c0_15 = arith.constant 0 : index
    %31 = vector.load %arg7[%c0_14, %c0_15] : memref<8x128xf32, #tpu.memory_space<vmem>>, vector<8x128xf32>
    tpu.vector_store %arg7[%c0_14, %c0_15], %30 {strides = array<i32>} : memref<8x128xf32, #tpu.memory_space<vmem>>, vector<8x128xf32>,
    %c0_i32_16 = arith.constant 0 : i32
    %32 = arith.cmpi eq, %arg1, %c0_i32_16 : i32
    %33 = arith.extui %32 : i1 to i32
    %c0_i32_17 = arith.constant 0 : i32
    %34 = arith.cmpi ne, %33, %c0_i32_17 : i32
    scf.if %34 {
      %c0_18 = arith.constant 0 : index
      %c0_19 = arith.constant 0 : index
      %35 = vector.load %arg7[%c0_18, %c0_19] : memref<8x128xf32, #tpu.memory_space<vmem>>, vector<8x128xf32>
      %cst_20 = arith.constant dense<0.000000e+00> : vector<128xf32>
      %36 = vector.multi_reduction <add>, %35, %cst_20 [0] : vector<8x128xf32> to vector<128xf32>
      %37 = vector.shape_cast %36 : vector<128xf32> to vector<1x128xf32>
      %cst_21 = arith.constant -6.250000e-02 : f32
      %38 = vector.broadcast %cst_21 : f32 to vector<1x128xf32>
      %39 = arith.mulf %37, %38 : vector<1x128xf32>
      %c0_22 = arith.constant 0 : index
      %c0_23 = arith.constant 0 : index
      %40 = vector.load %arg6[%c0_22, %c0_23] : memref<1x128xf32, #tpu.memory_space<vmem>>, vector<1x128xf32>
      tpu.vector_store %arg6[%c0_22, %c0_23], %39 {strides = array<i32>} : memref<1x128xf32, #tpu.memory_space<vmem>>, vector<1x128xf32>,
    } else {
    }
    return
  }
  func.func @transform_0(%arg0: i32, %arg1: i32) -> (i32, i32) {
    %c1_i32 = arith.constant 1 : i32
    %0 = arith.muli %arg0, %c1_i32 : i32
    %1 = arith.addi %0, %arg1 : i32
    %c0_i32 = arith.constant 0 : i32
    %2 = arith.minsi %1, %c0_i32 : i32
    %c0_i32_0 = arith.constant 0 : i32
    %c0_i32_1 = arith.constant 0 : i32
    return %2, %c0_i32_0 : i32, i32
  }
  func.func @transform_1(%arg0: i32, %arg1: i32) -> (i32, i32) {
    %c1_i32 = arith.constant 1 : i32
    %0 = arith.muli %arg0, %c1_i32 : i32
    %1 = arith.addi %0, %arg1 : i32
    %c0_i32 = arith.constant 0 : i32
    %2 = arith.minsi %1, %c0_i32 : i32
    %c0_i32_0 = arith.constant 0 : i32
    %c0_i32_1 = arith.constant 0 : i32
    return %2, %c0_i32_0 : i32, i32
  }
  func.func @transform_2(%arg0: i32, %arg1: i32) -> (i32, i32) {
    %c1_i32 = arith.constant 1 : i32
    %0 = arith.muli %arg0, %c1_i32 : i32
    %1 = arith.addi %0, %arg1 : i32
    %c0_i32 = arith.constant 0 : i32
    %2 = arith.minsi %1, %c0_i32 : i32
    %c0_i32_0 = arith.constant 0 : i32
    %c0_i32_1 = arith.constant 0 : i32
    return %2, %c0_i32_0 : i32, i32
  }
  func.func @transform_3(%arg0: i32, %arg1: i32) -> (i32, i32) {
    %c1_i32 = arith.constant 1 : i32
    %0 = arith.muli %arg0, %c1_i32 : i32
    %1 = arith.addi %0, %arg1 : i32
    %c0_i32 = arith.constant 0 : i32
    %2 = arith.minsi %1, %c0_i32 : i32
    %c0_i32_0 = arith.constant 0 : i32
    %c0_i32_1 = arith.constant 0 : i32
    return %2, %c0_i32_0 : i32, i32
  }
  func.func @transform_4(%arg0: i32, %arg1: i32) -> (i32, i32) {
    %c0_i32 = arith.constant 0 : i32
    %c0_i32_0 = arith.constant 0 : i32
    return %c0_i32, %arg0 : i32, i32
  }
}

</mosaic_0001>

<llo_original>
// kernel: censored_loss_sub.1
$region0: #{censored_loss_sub.1}
  #allocation0 [shape = 'u32[]', space=smem, size = 0x4, offset = 0x4, fixed_abs, tag = 'smem constant byte address 0x4 - core index']
  #allocation1 [shape = 'u32[144,128]{1,0:T(1,128)}', space=vmem, size = 0x12000, scoped, tag = 'internal scratch']
  #allocation2 [shape = 'f32[8,128]{1,0:T(8,128)}', space=vmem, size = 0x1000, scoped, tag = 'scratch operand']
  %s0 = inlined_call_operand.vmem [shape: f32[8,128], index: 0, kind: input, shape index: {}]
  %s1 = inlined_call_operand.vmem [shape: f32[8,128], index: 1, kind: input, shape index: {}]
  %s2 = inlined_call_operand.vmem [shape: f32[8,128], index: 2, kind: input, shape index: {}]
  %s3 = inlined_call_operand.vmem [shape: f32[8,128], index: 3, kind: input, shape index: {}]
  %s4 = inlined_call_operand.vmem [shape: f32[1,128], index: 4, kind: output, shape index: {}]
  %s5 = sld [smem:[#allocation0]]
  $region34: #{censored_loss_sub.1} parent=0
    _
  %s7 = ssub.s32 1, %s5
  %s8 = scalar_select 0, %s7, %s5
  // Predicated region
  $region2: #{censored_loss_sub.1} parent=0 // pred_check
    _
  $region3: #{censored_loss_sub.1} parent=0 // pred_check_branch
    %10 = sbr.rel (0) target = $region5
  $region4: #{censored_loss_sub.1} parent=0 // pred_region
    %s11 = sadd.s32 0, 0
    %p12 = scmp.lt.s32.totalorder %s11, 0
    %s13 = scalar_select %p12, %s11, 0
    %p14 = scmp.lt.s32.totalorder %s13, 0
    %s15 = scalar_select %p14, %s13, 0
    %s16 = smul.addr %s15, 8
    %s17 = scalar_lea.vmem %s0, %s16
    %s18 = sadd.s32 0, 0
    %p19 = scmp.lt.s32.totalorder %s18, 0
    %s20 = scalar_select %p19, %s18, 0
  $region5: #{censored_loss_sub.1} parent=0 // pred_fallthru
    _
  // Predicated region
  $region6: #{censored_loss_sub.1} parent=0 // pred_check
    _
  $region7: #{censored_loss_sub.1} parent=0 // pred_check_branch
    %22 = sbr.rel (0) target = $region9
  $region8: #{censored_loss_sub.1} parent=0 // pred_region
    %s23 = sadd.s32 0, 0
    %p24 = scmp.lt.s32.totalorder %s23, 0
    %s25 = scalar_select %p24, %s23, 0
    %p26 = scmp.lt.s32.totalorder %s25, 0
    %s27 = scalar_select %p26, %s25, 0
    %s28 = smul.addr %s27, 8
    %s29 = scalar_lea.vmem %s1, %s28
    %s30 = sadd.s32 0, 0
    %p31 = scmp.lt.s32.totalorder %s30, 0
    %s32 = scalar_select %p31, %s30, 0
  $region9: #{censored_loss_sub.1} parent=0 // pred_fallthru
    _
  // Predicated region
  $region10: #{censored_loss_sub.1} parent=0 // pred_check
    _
  $region11: #{censored_loss_sub.1} parent=0 // pred_check_branch
    %34 = sbr.rel (0) target = $region13
  $region12: #{censored_loss_sub.1} parent=0 // pred_region
    %s35 = sadd.s32 0, 0
    %p36 = scmp.lt.s32.totalorder %s35, 0
    %s37 = scalar_select %p36, %s35, 0
    %p38 = scmp.lt.s32.totalorder %s37, 0
    %s39 = scalar_select %p38, %s37, 0
    %s40 = smul.addr %s39, 8
    %s41 = scalar_lea.vmem %s2, %s40
    %s42 = sadd.s32 0, 0
    %p43 = scmp.lt.s32.totalorder %s42, 0
    %s44 = scalar_select %p43, %s42, 0
  $region13: #{censored_loss_sub.1} parent=0 // pred_fallthru
    _
  // Predicated region
  $region14: #{censored_loss_sub.1} parent=0 // pred_check
    _
  $region15: #{censored_loss_sub.1} parent=0 // pred_check_branch
    %46 = sbr.rel (0) target = $region17
  $region16: #{censored_loss_sub.1} parent=0 // pred_region
    %s47 = sadd.s32 0, 0
    %p48 = scmp.lt.s32.totalorder %s47, 0
    %s49 = scalar_select %p48, %s47, 0
    %p50 = scmp.lt.s32.totalorder %s49, 0
    %s51 = scalar_select %p50, %s49, 0
    %s52 = smul.addr %s51, 8
    %s53 = scalar_lea.vmem %s3, %s52
    %s54 = sadd.s32 0, 0
    %p55 = scmp.lt.s32.totalorder %s54, 0
    %s56 = scalar_select %p55, %s54, 0
  $region17: #{censored_loss_sub.1} parent=0 // pred_fallthru
    _
  %s57 = sadd.s32 0, 0
  %p58 = scmp.lt.s32.totalorder %s57, 0
  %s59 = scalar_select %p58, %s57, 0
  %p60 = scmp.lt.s32.totalorder %s59, 0
  %s61 = scalar_select %p60, %s59, 0
  %s62 = smul.addr %s61, 8
  %s63 = scalar_lea.vmem %s0, %s62
  %s64 = sadd.s32 0, 0
  %p65 = scmp.lt.s32.totalorder %s64, 0
  %s66 = scalar_select %p65, %s64, 0
  %p67 = scmp.lt.s32.totalorder %s66, 0
  %s68 = scalar_select %p67, %s66, 0
  %s69 = smul.addr %s68, 8
  %s70 = scalar_lea.vmem %s1, %s69
  %s71 = sadd.s32 0, 0
  %p72 = scmp.lt.s32.totalorder %s71, 0
  %s73 = scalar_select %p72, %s71, 0
  %p74 = scmp.lt.s32.totalorder %s73, 0
  %s75 = scalar_select %p74, %s73, 0
  %s76 = smul.addr %s75, 8
  %s77 = scalar_lea.vmem %s2, %s76
  %s78 = sadd.s32 0, 0
  %p79 = scmp.lt.s32.totalorder %s78, 0
  %s80 = scalar_select %p79, %s78, 0
  %p81 = scmp.lt.s32.totalorder %s80, 0
  %s82 = scalar_select %p81, %s80, 0
  %s83 = smul.addr %s82, 8
  %s84 = scalar_lea.vmem %s3, %s83
  %s85 = sadd.s32 0, 0
  %p86 = scmp.lt.s32.totalorder %s85, 0
  %s87 = scalar_select %p86, %s85, 0
  %p88 = scmp.lt.s32.totalorder %s87, 0
  %s89 = scalar_select %p88, %s87, 0
  %s90 = smul.addr %s89, 8
  %s91 = scalar_lea.vmem %s0, %s90
  %s92 = sadd.s32 0, 0
  %p93 = scmp.lt.s32.totalorder %s92, 0
  %s94 = scalar_select %p93, %s92, 0
  %s95 = sadd.s32 0, 0
  %p96 = scmp.lt.s32.totalorder %s95, 0
  %s97 = scalar_select %p96, %s95, 0
  %p98 = scmp.lt.s32.totalorder %s97, 0
  %s99 = scalar_select %p98, %s97, 0
  %s100 = smul.addr %s99, 8
  %s101 = scalar_lea.vmem %s1, %s100
  %s102 = sadd.s32 0, 0
  %p103 = scmp.lt.s32.totalorder %s102, 0
  %s104 = scalar_select %p103, %s102, 0
  %s105 = sadd.s32 0, 0
  %p106 = scmp.lt.s32.totalorder %s105, 0
  %s107 = scalar_select %p106, %s105, 0
  %p108 = scmp.lt.s32.totalorder %s107, 0
  %s109 = scalar_select %p108, %s107, 0
  %s110 = smul.addr %s109, 8
  %s111 = scalar_lea.vmem %s2, %s110
  %s112 = sadd.s32 0, 0
  %p113 = scmp.lt.s32.totalorder %s112, 0
  %s114 = scalar_select %p113, %s112, 0
  %s115 = sadd.s32 0, 0
  %p116 = scmp.lt.s32.totalorder %s115, 0
  %s117 = scalar_select %p116, %s115, 0
  %p118 = scmp.lt.s32.totalorder %s117, 0
  %s119 = scalar_select %p118, %s117, 0
  %s120 = smul.addr %s119, 8
  %s121 = scalar_lea.vmem %s3, %s120
  %s122 = sadd.s32 0, 0
  %p123 = scmp.lt.s32.totalorder %s122, 0
  %s124 = scalar_select %p123, %s122, 0
  %p125 = scmp.eq.s32.totalorder 0, 0
  // Predicated region
  $region18: #{censored_loss_sub.1} parent=0 // pred_check
    %p126 = pneg %p125
  $region19: #{censored_loss_sub.1} parent=0 // pred_check_branch
    %128 = sbr.rel (%p126) target = $region21
  $region20: #{censored_loss_sub.1} parent=0 // pred_region
    %129 = vst [vmem:[#allocation2] sm:$0xff] 0.0
  $region21: #{censored_loss_sub.1} parent=0 // pred_fallthru
    _
  %v130 = vld [vmem:[%s91] sm:$0xff]
  %v131 = vld [vmem:[%s101] sm:$0xff]
  %v132 = vld [vmem:[%s111] sm:$0xff]
  %v133 = vld [vmem:[%s121] sm:$0xff]
  %s134 = sadd.s32 0, 0
  %s135 = smul.u32 %s134, 8
  %v136 = vlaneseq
  %v137 = vshrl.u32 %v136, 7
  %v138 = vstv %s135
  %v139 = vadd.s32 %v138, %v137
  %vm140 = vcmp.lt.s32.totalorder %v139, 8
  %v141 = vsub.f32 1.0, %v130
  %v142 = vadd.f32 %v141, 1e-08
  %v143 = vlog2.pop %v142
  %v144 = vmul.f32 %v143, 0.6931472
  %v145 = vmul.f32 %v131, %v144
  %v146 = vadd.f32 %v130, 1e-08
  %v147 = vlog2.pop %v146
  %v148 = vmul.f32 %v147, 0.6931472
  %v149 = vmul.f32 %v132, %v148
  %v150 = vadd.f32 %v145, %v149
  %v151 = vmul.f32 %v150, %v133
  %v152 = vld [vmem:[#allocation2] sm:$0xff]
  %v153 = vsel %vm140, %v151, 0.0
  %v154 = vadd.f32 %v152, %v153
  %155 = vst [vmem:[#allocation2] sm:$0xff] %v154
  // Predicated region
  $region22: #{censored_loss_sub.1} parent=0 // pred_check
    %p156 = pneg %p125
  $region23: #{censored_loss_sub.1} parent=0 // pred_check_branch
    %158 = sbr.rel (%p156) target = $region25
  $region24: #{censored_loss_sub.1} parent=0 // pred_region
    %v159 = vld [vmem:[#allocation2] sm:$0xff]
    %v160 = vrot.slane %v159, 4
    %v161 = vadd.f32 %v159, %v160
    %v162 = vrot.slane %v161, 2
    %v163 = vadd.f32 %v161, %v162
    %v164 = vrot.slane %v163, 1
    %v165 = vadd.f32 %v163, %v164
    %v166 = vmul.f32 %v165, -0.0625
    %167 = vst [vmem:[%s4] sm:$0x1] %v166
  $region25: #{censored_loss_sub.1} parent=0 // pred_fallthru
    _
  // Predicated region
  $region26: #{censored_loss_sub.1} parent=0 // pred_check
    _
  $region27: #{censored_loss_sub.1} parent=0 // pred_check_branch
    %169 = sbr.rel (0) target = $region29
  $region28: #{censored_loss_sub.1} parent=0 // pred_region
    _
  $region29: #{censored_loss_sub.1} parent=0 // pred_fallthru
    _
  // Predicated region
  $region30: #{censored_loss_sub.1} parent=0 // pred_check
    _
  $region31: #{censored_loss_sub.1} parent=0 // pred_check_branch
    %171 = sbr.rel (0) target = $region33
  $region32: #{censored_loss_sub.1} parent=0 // pred_region
    _
  $region33: #{censored_loss_sub.1} parent=0 // pred_fallthru
    _

</llo_original>
